<compile_context>
chip_gen: v6e
topology: v6e:2x2x1
jax: 0.10.0
libtpu: 0.0.40
codegen_flags: <defaults>
</compile_context>

<pallas_src>
import jax
import jax.numpy as jnp
from jax.experimental import pallas as pl
from jax.experimental.pallas import tpu as pltpu

H1, H2 = 400, 200        # logical hidden sizes (nn.Linear(n_states,400), (400,200))
H1_P, H2_P = 512, 256    # lane/MXU-padded hidden sizes
LANE = 128               # lane width
SUB = 16                 # bf16 sublane packing
TB_MAX = 256             # batch tile (rows per grid step)


def _round_up(x, m):
    return ((x + m - 1) // m) * m


def qnet_kernel(x_ref, w1_ref, b1_ref, w2_ref, b2_ref, w3_ref, b3_ref, o_ref):
    # Layer 1: Linear + ReLU (bf16 operands on the MXU, f32 accumulation).
    h1 = jnp.dot(x_ref[...], w1_ref[...], preferred_element_type=jnp.float32)
    h1 = jnp.maximum(h1 + b1_ref[...], 0.0).astype(jnp.bfloat16)
    # Layer 2: Linear + ReLU.
    h2 = jnp.dot(h1, w2_ref[...], preferred_element_type=jnp.float32)
    h2 = jnp.maximum(h2 + b2_ref[...], 0.0).astype(jnp.bfloat16)
    # Layer 3: Linear (no activation); lane-dense (TB, 128) output block.
    o_ref[...] = (jnp.dot(h2, w3_ref[...], preferred_element_type=jnp.float32)
                  + b3_ref[...]).astype(o_ref.dtype)


def _prepare_params(params, n_states, n_actions):
    """Zero-pad weights/biases to lane-dense shapes; weights -> bf16, biases stay f32."""
    w1, b1, w2, b2, w3, b3 = params
    d_in_p = _round_up(max(n_states, 1), LANE)
    d_out_p = _round_up(max(n_actions, 1), LANE)

    def pad_w(w, ip, op):
        return jnp.pad(w, ((0, ip - w.shape[0]), (0, op - w.shape[1]))).astype(jnp.bfloat16)

    def pad_b(b, op):
        return jnp.pad(b, ((0, 0), (0, op - b.shape[1]))).astype(jnp.float32)

    padded = (pad_w(w1, d_in_p, H1_P), pad_b(b1, H1_P),
              pad_w(w2, H1_P, H2_P), pad_b(b2, H2_P),
              pad_w(w3, H2_P, d_out_p), pad_b(b3, d_out_p))
    return padded, d_in_p, d_out_p


def qnet_forward(x, params):
    """x: (B, n_states) f32.  Returns (B, n_actions) f32 Q-values."""
    B, n_states = x.shape
    n_actions = params[4].shape[1]
    (w1p, b1p, w2p, b2p, w3p, b3p), d_in_p, d_out_p = _prepare_params(
        params, n_states, n_actions)

    # Pad batch to a multiple of the sublane pack (16 for bf16); tile with TB_MAX rows.
    b_pad = _round_up(max(B, SUB), SUB)
    if b_pad > TB_MAX:
        b_pad = _round_up(b_pad, TB_MAX)
        tb = TB_MAX
    else:
        tb = b_pad

    x_p = jnp.pad(x, ((0, b_pad - B), (0, d_in_p - n_states))).astype(jnp.bfloat16)

    const = lambda i: (0, 0)          # weights/biases: same block every grid step (resident)
    out_p = pl.pallas_call(
        qnet_kernel,
        out_shape=jax.ShapeDtypeStruct((b_pad, d_out_p), jnp.float32),
        grid=(b_pad // tb,),
        in_specs=[
            pl.BlockSpec((tb, d_in_p), lambda i: (i, 0)),     # x: batch-tiled
            pl.BlockSpec((d_in_p, H1_P), const),
            pl.BlockSpec((1, H1_P), const),
            pl.BlockSpec((H1_P, H2_P), const),
            pl.BlockSpec((1, H2_P), const),
            pl.BlockSpec((H2_P, d_out_p), const),
            pl.BlockSpec((1, d_out_p), const),
        ],
        out_specs=pl.BlockSpec((tb, d_out_p), lambda i: (i, 0)),
        compiler_params=pltpu.CompilerParams(
            dimension_semantics=("parallel",)),               # shard batch across TCs (v7x)
    )(x_p, w1p, b1p, w2p, b2p, w3p, b3p)

    return out_p[:B, :n_actions]


def init_qnet_params(key, n_states, n_actions):
    """Deterministic init mirroring nn.Linear default: U(-1/sqrt(fan_in), 1/sqrt(fan_in))."""
    dims = [(n_states, H1), (H1, H2), (H2, n_actions)]
    params = []
    for (fan_in, fan_out) in dims:
        key, kw, kb = jax.random.split(key, 3)
        bound = 1.0 / jnp.sqrt(jnp.float32(fan_in))
        w = jax.random.uniform(kw, (fan_in, fan_out), jnp.float32, -bound, bound)
        b = jax.random.uniform(kb, (1, fan_out), jnp.float32, -bound, bound)
        params += [w, b]
    return params


def qnet_reference(x, params):
    """Full-f32 reference of the original forward pass."""
    w1, b1, w2, b2, w3, b3 = params
    h1 = jnp.maximum(x @ w1 + b1, 0.0)
    h2 = jnp.maximum(h1 @ w2 + b2, 0.0)
    return h2 @ w3 + b3


def qnet_reference_quantized(x, params):
    """Reference that mirrors the kernel's bf16-input / f32-accumulate numerics."""
    w1, b1, w2, b2, w3, b3 = params
    q = lambda a: a.astype(jnp.bfloat16).astype(jnp.float32)
    h1 = q(jnp.maximum(q(x) @ q(w1) + b1, 0.0))
    h2 = q(jnp.maximum(h1 @ q(w2) + b2, 0.0))
    return h2 @ q(w3) + b3


if __name__ == "__main__":
    n_states, n_actions, batch = 8, 4, 2
    key = jax.random.PRNGKey(0)
    key, kx, kx2 = jax.random.split(key, 3)
    x = jax.random.normal(kx, (batch, n_states), jnp.float32)
    params = init_qnet_params(key, n_states, n_actions)

    # Small-batch path (single grid step, batch padded to 16).
    out = qnet_forward(x, params)
    jax.block_until_ready(out)
    assert out.shape == (batch, n_actions)
    assert jnp.allclose(out, qnet_reference_quantized(x, params), atol=1e-3, rtol=1e-3)
    assert jnp.allclose(out, qnet_reference(x, params), atol=5e-2, rtol=5e-2)

    # Larger batch exercises the multi-tile grid + padded-remainder path (600 -> 768 = 3 tiles).
    x_big = jax.random.normal(kx2, (600, n_states), jnp.float32)
    out_big = qnet_forward(x_big, params)
    jax.block_until_ready(out_big)
    assert out_big.shape == (600, n_actions)
    assert jnp.allclose(out_big, qnet_reference_quantized(x_big, params), atol=1e-3, rtol=1e-3)
    assert jnp.allclose(out_big, qnet_reference(x_big, params), atol=5e-2, rtol=5e-2)

    print("KERNEL_OK")
</pallas_src>

<mosaic_0001>
module attributes {stable_mosaic.version = 11 : i64} {
  func.func @qnet_kernel(%arg0: i32, %arg1: memref<16x128xbf16, #tpu.memory_space<vmem>>, %arg2: memref<128x512xbf16, #tpu.memory_space<vmem>>, %arg3: memref<1x512xf32, #tpu.memory_space<vmem>>, %arg4: memref<512x256xbf16, #tpu.memory_space<vmem>>, %arg5: memref<1x256xf32, #tpu.memory_space<vmem>>, %arg6: memref<256x128xbf16, #tpu.memory_space<vmem>>, %arg7: memref<1x128xf32, #tpu.memory_space<vmem>>, %arg8: memref<16x128xf32, #tpu.memory_space<vmem>>) attributes {dimension_semantics = [#tpu.dimension_semantics<parallel>], iteration_bounds = array<i64: 1>, scalar_prefetch = 0 : i64, scratch_operands = 0 : i64, tpu.core_type = #tpu.core_type<tc>, window_params = [{transform_indices = @transform_0, window_bounds = array<i64: 16, 128>}, {pipeline_mode = #tpu.pipeline_mode<synchronous>, transform_indices = @transform_1, window_bounds = array<i64: 128, 512>}, {pipeline_mode = #tpu.pipeline_mode<synchronous>, transform_indices = @transform_2, window_bounds = array<i64: 1, 512>}, {pipeline_mode = #tpu.pipeline_mode<synchronous>, transform_indices = @transform_3, window_bounds = array<i64: 512, 256>}, {pipeline_mode = #tpu.pipeline_mode<synchronous>, transform_indices = @transform_4, window_bounds = array<i64: 1, 256>}, {pipeline_mode = #tpu.pipeline_mode<synchronous>, transform_indices = @transform_5, window_bounds = array<i64: 256, 128>}, {pipeline_mode = #tpu.pipeline_mode<synchronous>, transform_indices = @transform_6, window_bounds = array<i64: 1, 128>}, {transform_indices = @transform_7, window_bounds = array<i64: 16, 128>}]} {
    %c0 = arith.constant 0 : index
    %c0_0 = arith.constant 0 : index
    %0 = vector.load %arg1[%c0, %c0_0] : memref<16x128xbf16, #tpu.memory_space<vmem>>, vector<16x128xbf16>
    %c0_1 = arith.constant 0 : index
    %c0_2 = arith.constant 0 : index
    %1 = vector.load %arg2[%c0_1, %c0_2] : memref<128x512xbf16, #tpu.memory_space<vmem>>, vector<128x512xbf16>
    %cst = arith.constant dense<0.000000e+00> : vector<16x512xf32>
    %2 = tpu.matmul %0, %1, %cst {dimension_numbers = #tpu.dot_dimension_numbers<[1], [0], [0], [1], [0, 0, 1, 1], [], []>} : vector<16x128xbf16>, vector<128x512xbf16>, vector<16x512xf32> -> vector<16x512xf32>
    %c0_3 = arith.constant 0 : index
    %c0_4 = arith.constant 0 : index
    %3 = vector.load %arg3[%c0_3, %c0_4] : memref<1x512xf32, #tpu.memory_space<vmem>>, vector<1x512xf32>
    %4 = vector.broadcast %3 : vector<1x512xf32> to vector<16x512xf32>
    %5 = arith.addf %2, %4 : vector<16x512xf32>
    %cst_5 = arith.constant 0.000000e+00 : f32
    %6 = vector.broadcast %cst_5 : f32 to vector<16x512xf32>
    %7 = arith.maximumf %5, %6 : vector<16x512xf32>
    %8 = arith.truncf %7 : vector<16x512xf32> to vector<16x512xbf16>
    %c0_6 = arith.constant 0 : index
    %c0_7 = arith.constant 0 : index
    %9 = vector.load %arg4[%c0_6, %c0_7] : memref<512x256xbf16, #tpu.memory_space<vmem>>, vector<512x256xbf16>
    %cst_8 = arith.constant dense<0.000000e+00> : vector<16x256xf32>
    %10 = tpu.matmul %8, %9, %cst_8 {dimension_numbers = #tpu.dot_dimension_numbers<[1], [0], [0], [1], [0, 0, 1, 1], [], []>} : vector<16x512xbf16>, vector<512x256xbf16>, vector<16x256xf32> -> vector<16x256xf32>
    %c0_9 = arith.constant 0 : index
    %c0_10 = arith.constant 0 : index
    %11 = vector.load %arg5[%c0_9, %c0_10] : memref<1x256xf32, #tpu.memory_space<vmem>>, vector<1x256xf32>
    %12 = vector.broadcast %11 : vector<1x256xf32> to vector<16x256xf32>
    %13 = arith.addf %10, %12 : vector<16x256xf32>
    %cst_11 = arith.constant 0.000000e+00 : f32
    %14 = vector.broadcast %cst_11 : f32 to vector<16x256xf32>
    %15 = arith.maximumf %13, %14 : vector<16x256xf32>
    %16 = arith.truncf %15 : vector<16x256xf32> to vector<16x256xbf16>
    %c0_12 = arith.constant 0 : index
    %c0_13 = arith.constant 0 : index
    %17 = vector.load %arg6[%c0_12, %c0_13] : memref<256x128xbf16, #tpu.memory_space<vmem>>, vector<256x128xbf16>
    %cst_14 = arith.constant dense<0.000000e+00> : vector<16x128xf32>
    %18 = tpu.matmul %16, %17, %cst_14 {dimension_numbers = #tpu.dot_dimension_numbers<[1], [0], [0], [1], [0, 0, 1, 1], [], []>} : vector<16x256xbf16>, vector<256x128xbf16>, vector<16x128xf32> -> vector<16x128xf32>
    %c0_15 = arith.constant 0 : index
    %c0_16 = arith.constant 0 : index
    %19 = vector.load %arg7[%c0_15, %c0_16] : memref<1x128xf32, #tpu.memory_space<vmem>>, vector<1x128xf32>
    %20 = vector.broadcast %19 : vector<1x128xf32> to vector<16x128xf32>
    %21 = arith.addf %18, %20 : vector<16x128xf32>
    %c0_17 = arith.constant 0 : index
    %c0_18 = arith.constant 0 : index
    %22 = vector.load %arg8[%c0_17, %c0_18] : memref<16x128xf32, #tpu.memory_space<vmem>>, vector<16x128xf32>
    tpu.vector_store %arg8[%c0_17, %c0_18], %21 {strides = array<i32>} : memref<16x128xf32, #tpu.memory_space<vmem>>, vector<16x128xf32>,
    return
  }
  func.func @transform_0(%arg0: i32) -> (i32, i32) {
    %c0_i32 = arith.constant 0 : i32
    %c0_i32_0 = arith.constant 0 : i32
    return %arg0, %c0_i32 : i32, i32
  }
  func.func @transform_1(%arg0: i32) -> (i32, i32) {
    %c0_i32 = arith.constant 0 : i32
    %c0_i32_0 = arith.constant 0 : i32
    %c0_i32_1 = arith.constant 0 : i32
    return %c0_i32, %c0_i32_0 : i32, i32
  }
  func.func @transform_2(%arg0: i32) -> (i32, i32) {
    %c0_i32 = arith.constant 0 : i32
    %c0_i32_0 = arith.constant 0 : i32
    %c0_i32_1 = arith.constant 0 : i32
    return %c0_i32, %c0_i32_0 : i32, i32
  }
  func.func @transform_3(%arg0: i32) -> (i32, i32) {
    %c0_i32 = arith.constant 0 : i32
    %c0_i32_0 = arith.constant 0 : i32
    %c0_i32_1 = arith.constant 0 : i32
    return %c0_i32, %c0_i32_0 : i32, i32
  }
  func.func @transform_4(%arg0: i32) -> (i32, i32) {
    %c0_i32 = arith.constant 0 : i32
    %c0_i32_0 = arith.constant 0 : i32
    %c0_i32_1 = arith.constant 0 : i32
    return %c0_i32, %c0_i32_0 : i32, i32
  }
  func.func @transform_5(%arg0: i32) -> (i32, i32) {
    %c0_i32 = arith.constant 0 : i32
    %c0_i32_0 = arith.constant 0 : i32
    %c0_i32_1 = arith.constant 0 : i32
    return %c0_i32, %c0_i32_0 : i32, i32
  }
  func.func @transform_6(%arg0: i32) -> (i32, i32) {
    %c0_i32 = arith.constant 0 : i32
    %c0_i32_0 = arith.constant 0 : i32
    %c0_i32_1 = arith.constant 0 : i32
    return %c0_i32, %c0_i32_0 : i32, i32
  }
  func.func @transform_7(%arg0: i32) -> (i32, i32) {
    %c0_i32 = arith.constant 0 : i32
    %c0_i32_0 = arith.constant 0 : i32
    return %arg0, %c0_i32 : i32, i32
  }
}

</mosaic_0001>

<llo_original>
// kernel: tpu_custom_call.1
$region0: #{tpu_custom_call.1}
  #allocation0 [shape = 'u32[]', space=smem, size = 0x4, offset = 0x4, fixed_abs, tag = 'smem constant byte address 0x4 - core index']
  #allocation1 [shape = 'u32[144,128]{1,0:T(1,128)}', space=vmem, size = 0x12000, scoped, tag = 'internal scratch']
  %s0 = inlined_call_operand.hbm [shape: bf16[16,128], index: 0, kind: input, shape index: {}]
  %s1 = inlined_call_operand.hbm [shape: bf16[128,512], index: 1, kind: input, shape index: {}]
  %s2 = inlined_call_operand.hbm [shape: f32[1,512], index: 2, kind: input, shape index: {}]
  %s3 = inlined_call_operand.hbm [shape: bf16[512,256], index: 3, kind: input, shape index: {}]
  %s4 = inlined_call_operand.vmem [shape: f32[1,256], index: 4, kind: input, shape index: {}]
  %s5 = inlined_call_operand.hbm [shape: bf16[256,128], index: 5, kind: input, shape index: {}]
  %s6 = inlined_call_operand.vmem [shape: f32[1,128], index: 6, kind: input, shape index: {}]
  %s7 = inlined_call_operand.hbm [shape: f32[16,128], index: 7, kind: output, shape index: {}]
  %s8 = sld [smem:[#allocation0]]
  $region58: #{tpu_custom_call.1} parent=0
    _
  %s10 = ssub.s32 1, %s8
  %s11 = scalar_select 0, %s10, %s8
  $region1: #{tpu_custom_call.1} parent=0
    #allocation2 [shape = 'u8[4096]{0}', space=vmem, size = 0x1000, scoped, tag = 'input window, operand 0, single buffered']
    #allocation3 [shape = 's32[1]{0}', space=sflag, size = 0x4, scoped, tag = 'scoped memory for tpu_custom_call.1']
    #allocation4 [shape = 's32[1]{0}', space=sflag, size = 0x4, scoped, tag = 'scoped memory for tpu_custom_call.1']
    #allocation5 [shape = 'u8[131072]{0}', space=vmem, size = 0x20000, scoped, tag = 'input window, operand 1, single buffered']
    #allocation6 [shape = 's32[1]{0}', space=sflag, size = 0x4, scoped, tag = 'scoped memory for tpu_custom_call.1']
    #allocation7 [shape = 'u8[2048]{0}', space=vmem, size = 0x800, scoped, tag = 'input window, operand 2, single buffered']
    #allocation8 [shape = 'u8[262144]{0}', space=vmem, size = 0x40000, scoped, tag = 'input window, operand 3, single buffered']
    #allocation9 [shape = 's32[1]{0}', space=sflag, size = 0x4, scoped, tag = 'scoped memory for tpu_custom_call.1']
    #allocation10 [shape = 'u8[65536]{0}', space=vmem, size = 0x10000, scoped, tag = 'input window, operand 5, single buffered']
    #allocation11 [shape = 'u8[8192]{0}', space=vmem, size = 0x2000, scoped, tag = 'output window, operand 0, single buffered']
    %12 = vsyncpa [#allocation3], 0
    %13 = vsyncpa [#allocation6], 0
    %14 = vsyncpa [#allocation9], 0
    %15 = vsyncpa [#allocation4], 0
    // Predicated region
    $region2: #{tpu_custom_call.1} parent=1 // pred_check
      _
    $region3: #{tpu_custom_call.1} parent=1 // pred_check_branch
      %17 = sbr.rel (0) target = $region5
    $region4: #{tpu_custom_call.1} parent=1 // pred_region
      %s19 = ssub.s32 128, 128
      %20 = vsyncadd [#allocation3], %s19
      %s21 = sshll.u32 [#allocation2], 4
      %s22 = int_to_ptr.vmem [resolvable:$true] %s21
      %27 = dma.hbm_to_vmem [thread:$0]  %s0, 128, %s22, [#allocation3], 64, 64, 4
    $region5: #{tpu_custom_call.1} parent=1 // pred_fallthru
      _
    // Predicated region
    $region6: #{tpu_custom_call.1} parent=1 // pred_check
      _
    $region7: #{tpu_custom_call.1} parent=1 // pred_check_branch
      %29 = sbr.rel (0) target = $region9
    $region8: #{tpu_custom_call.1} parent=1 // pred_region
      %s31 = ssub.s32 4096, 4096
      %32 = vsyncadd [#allocation6], %s31
      %s33 = sshll.u32 [#allocation5], 4
      %s34 = int_to_ptr.vmem [resolvable:$true] %s33
      %39 = dma.hbm_to_vmem [thread:$0]  %s1, 4096, %s34, [#allocation6], 256, 256, 16
    $region9: #{tpu_custom_call.1} parent=1 // pred_fallthru
      _
    // Predicated region
    $region10: #{tpu_custom_call.1} parent=1 // pred_check
      _
    $region11: #{tpu_custom_call.1} parent=1 // pred_check_branch
      %41 = sbr.rel (0) target = $region13
    $region12: #{tpu_custom_call.1} parent=1 // pred_region
      %s43 = ssub.s32 64, 64
      %44 = vsyncadd [#allocation6], %s43
      %s46 = sshll.u32 [#allocation7], 4
      %s47 = int_to_ptr.vmem [resolvable:$true] %s46
      %49 = dma.hbm_to_vmem [thread:$0]  %s2, 64, %s47, [#allocation6]
    $region13: #{tpu_custom_call.1} parent=1 // pred_fallthru
      _
    // Predicated region
    $region14: #{tpu_custom_call.1} parent=1 // pred_check
      _
    $region15: #{tpu_custom_call.1} parent=1 // pred_check_branch
      %51 = sbr.rel (0) target = $region17
    $region16: #{tpu_custom_call.1} parent=1 // pred_region
      %s53 = ssub.s32 8192, 8192
      %54 = vsyncadd [#allocation9], %s53
      %s55 = sshll.u32 [#allocation8], 4
      %s56 = int_to_ptr.vmem [resolvable:$true] %s55
      %61 = dma.hbm_to_vmem [thread:$0]  %s3, 8192, %s56, [#allocation9], 128, 128, 8
    $region17: #{tpu_custom_call.1} parent=1 // pred_fallthru
      _
    // Predicated region
    $region18: #{tpu_custom_call.1} parent=1 // pred_check
      _
    $region19: #{tpu_custom_call.1} parent=1 // pred_check_branch
      %63 = sbr.rel (0) target = $region21
    $region20: #{tpu_custom_call.1} parent=1 // pred_region
      _
    $region21: #{tpu_custom_call.1} parent=1 // pred_fallthru
      _
    // Predicated region
    $region22: #{tpu_custom_call.1} parent=1 // pred_check
      _
    $region23: #{tpu_custom_call.1} parent=1 // pred_check_branch
      %65 = sbr.rel (0) target = $region25
    $region24: #{tpu_custom_call.1} parent=1 // pred_region
      %s67 = ssub.s32 2048, 2048
      %68 = vsyncadd [#allocation9], %s67
      %s69 = sshll.u32 [#allocation10], 4
      %s70 = int_to_ptr.vmem [resolvable:$true] %s69
      %75 = dma.hbm_to_vmem [thread:$0]  %s5, 2048, %s70, [#allocation9], 64, 64, 4
    $region25: #{tpu_custom_call.1} parent=1 // pred_fallthru
      _
    // Predicated region
    $region26: #{tpu_custom_call.1} parent=1 // pred_check
      _
    $region27: #{tpu_custom_call.1} parent=1 // pred_check_branch
      %77 = sbr.rel (0) target = $region29
    $region28: #{tpu_custom_call.1} parent=1 // pred_region
      _
    $region29: #{tpu_custom_call.1} parent=1 // pred_fallthru
      _
    // Predicated region
    $region30: #{tpu_custom_call.1} parent=1 // pred_check
      _
    $region31: #{tpu_custom_call.1} parent=1 // pred_check_branch
      %79 = sbr.rel (0) target = $region33
    $region32: #{tpu_custom_call.1} parent=1 // pred_region
      %80 = dma.done [#allocation3], 128
    $region33: #{tpu_custom_call.1} parent=1 // pred_fallthru
      _
    // Predicated region
    $region34: #{tpu_custom_call.1} parent=1 // pred_check
      _
    $region35: #{tpu_custom_call.1} parent=1 // pred_check_branch
      %82 = sbr.rel (0) target = $region37
    $region36: #{tpu_custom_call.1} parent=1 // pred_region
      %83 = dma.done [#allocation6], 4096
    $region37: #{tpu_custom_call.1} parent=1 // pred_fallthru
      _
    // Predicated region
    $region38: #{tpu_custom_call.1} parent=1 // pred_check
      _
    $region39: #{tpu_custom_call.1} parent=1 // pred_check_branch
      %85 = sbr.rel (0) target = $region41
    $region40: #{tpu_custom_call.1} parent=1 // pred_region
      %86 = dma.done [#allocation6], 64
    $region41: #{tpu_custom_call.1} parent=1 // pred_fallthru
      _
    // Predicated region
    $region42: #{tpu_custom_call.1} parent=1 // pred_check
      _
    $region43: #{tpu_custom_call.1} parent=1 // pred_check_branch
      %88 = sbr.rel (0) target = $region45
    $region44: #{tpu_custom_call.1} parent=1 // pred_region
      %89 = dma.done [#allocation9], 8192
    $region45: #{tpu_custom_call.1} parent=1 // pred_fallthru
      _
    // Predicated region
    $region46: #{tpu_custom_call.1} parent=1 // pred_check
      _
    $region47: #{tpu_custom_call.1} parent=1 // pred_check_branch
      %91 = sbr.rel (0) target = $region49
    $region48: #{tpu_custom_call.1} parent=1 // pred_region
      %92 = dma.done [#allocation9], 2048
    $region49: #{tpu_custom_call.1} parent=1 // pred_fallthru
      _
    %v94 = vld [vmem:[#allocation2] sm:$0xf]
    %v95 = vld [vmem:[#allocation2 + $0x4] sm:$0xf]
    %v96 = vld [vmem:[#allocation5] sm:$0xff]
    %v97 = vld [vmem:[#allocation5 + $0x8] sm:$0xff]
    %v98 = vld [vmem:[#allocation5 + $0x10] sm:$0xff]
    %v99 = vld [vmem:[#allocation5 + $0x18] sm:$0xff]
    %v100 = vld [vmem:[#allocation5 + $0x20] sm:$0xff]
    %v101 = vld [vmem:[#allocation5 + $0x28] sm:$0xff]
    %v102 = vld [vmem:[#allocation5 + $0x30] sm:$0xff]
    %v103 = vld [vmem:[#allocation5 + $0x38] sm:$0xff]
    %v104 = vld [vmem:[#allocation5 + $0x40] sm:$0xff]
    %v105 = vld [vmem:[#allocation5 + $0x48] sm:$0xff]
    %v106 = vld [vmem:[#allocation5 + $0x50] sm:$0xff]
    %v107 = vld [vmem:[#allocation5 + $0x58] sm:$0xff]
    %v108 = vld [vmem:[#allocation5 + $0x60] sm:$0xff]
    %v109 = vld [vmem:[#allocation5 + $0x68] sm:$0xff]
    %v110 = vld [vmem:[#allocation5 + $0x70] sm:$0xff]
    %v111 = vld [vmem:[#allocation5 + $0x78] sm:$0xff]
    %v112 = vld [vmem:[#allocation5 + $0x80] sm:$0xff]
    %v113 = vld [vmem:[#allocation5 + $0x88] sm:$0xff]
    %v114 = vld [vmem:[#allocation5 + $0x90] sm:$0xff]
    %v115 = vld [vmem:[#allocation5 + $0x98] sm:$0xff]
    %v116 = vld [vmem:[#allocation5 + $0xa0] sm:$0xff]
    %v117 = vld [vmem:[#allocation5 + $0xa8] sm:$0xff]
    %v118 = vld [vmem:[#allocation5 + $0xb0] sm:$0xff]
    %v119 = vld [vmem:[#allocation5 + $0xb8] sm:$0xff]
    %v120 = vld [vmem:[#allocation5 + $0xc0] sm:$0xff]
    %v121 = vld [vmem:[#allocation5 + $0xc8] sm:$0xff]
    %v122 = vld [vmem:[#allocation5 + $0xd0] sm:$0xff]
    %v123 = vld [vmem:[#allocation5 + $0xd8] sm:$0xff]
    %v124 = vld [vmem:[#allocation5 + $0xe0] sm:$0xff]
    %v125 = vld [vmem:[#allocation5 + $0xe8] sm:$0xff]
    %v126 = vld [vmem:[#allocation5 + $0xf0] sm:$0xff]
    %v127 = vld [vmem:[#allocation5 + $0xf8] sm:$0xff]
    %v128 = vld [vmem:[#allocation7] sm:$0xf]
    %v130 = vlaneseq
    %v131 = vshrl.u32 %v130, 7
    %v132 = vsub.s32 0, %v131
    %v133 = vrot.slane %v128, %v132
    %v134 = vlaneseq
    %v135 = vshrl.u32 %v134, 7
    %v136 = vsub.s32 1, %v135
    %v137 = vrot.slane %v128, %v136
    %v138 = vlaneseq
    %v139 = vshrl.u32 %v138, 7
    %v140 = vsub.s32 2, %v139
    %v141 = vrot.slane %v128, %v140
    %v142 = vlaneseq
    %v143 = vshrl.u32 %v142, 7
    %v144 = vsub.s32 3, %v143
    %v145 = vrot.slane %v128, %v144
    %v152 = vunpack.c.l.b16 %v94
    %v153 = vunpack.c.l.b16 %v95
    %v154 = vpack.c.b16 %v153, %v152
    %v188 = vunpack.c.l.b16 %v96
    %v189 = vunpack.c.h.b16 %v96
    %v190 = vunpack.c.l.b16 %v97
    %v191 = vunpack.c.h.b16 %v97
    %v192 = vunpack.c.l.b16 %v98
    %v193 = vunpack.c.h.b16 %v98
    %v194 = vunpack.c.l.b16 %v99
    %v195 = vunpack.c.h.b16 %v99
    %v196 = vunpack.c.l.b16 %v100
    %v197 = vunpack.c.h.b16 %v100
    %v198 = vunpack.c.l.b16 %v101
    %v199 = vunpack.c.h.b16 %v101
    %v200 = vunpack.c.l.b16 %v102
    %v201 = vunpack.c.h.b16 %v102
    %v202 = vunpack.c.l.b16 %v103
    %v203 = vunpack.c.h.b16 %v103
    %v204 = vunpack.c.l.b16 %v104
    %v205 = vunpack.c.h.b16 %v104
    %v206 = vunpack.c.l.b16 %v105
    %v207 = vunpack.c.h.b16 %v105
    %v208 = vunpack.c.l.b16 %v106
    %v209 = vunpack.c.h.b16 %v106
    %v210 = vunpack.c.l.b16 %v107
    %v211 = vunpack.c.h.b16 %v107
    %v212 = vunpack.c.l.b16 %v108
    %v213 = vunpack.c.h.b16 %v108
    %v214 = vunpack.c.l.b16 %v109
    %v215 = vunpack.c.h.b16 %v109
    %v216 = vunpack.c.l.b16 %v110
    %v217 = vunpack.c.h.b16 %v110
    %v218 = vunpack.c.l.b16 %v111
    %v219 = vunpack.c.h.b16 %v111
    %v220 = vunpack.c.l.b16 %v112
    %v221 = vunpack.c.h.b16 %v112
    %v222 = vunpack.c.l.b16 %v113
    %v223 = vunpack.c.h.b16 %v113
    %v224 = vunpack.c.l.b16 %v114
    %v225 = vunpack.c.h.b16 %v114
    %v226 = vunpack.c.l.b16 %v115
    %v227 = vunpack.c.h.b16 %v115
    %v228 = vunpack.c.l.b16 %v116
    %v229 = vunpack.c.h.b16 %v116
    %v230 = vunpack.c.l.b16 %v117
    %v231 = vunpack.c.h.b16 %v117
    %v232 = vunpack.c.l.b16 %v118
    %v233 = vunpack.c.h.b16 %v118
    %v234 = vunpack.c.l.b16 %v119
    %v235 = vunpack.c.h.b16 %v119
    %v236 = vunpack.c.l.b16 %v120
    %v237 = vunpack.c.h.b16 %v120
    %v238 = vunpack.c.l.b16 %v121
    %v239 = vunpack.c.h.b16 %v121
    %v240 = vunpack.c.l.b16 %v122
    %v241 = vunpack.c.h.b16 %v122
    %v242 = vunpack.c.l.b16 %v123
    %v243 = vunpack.c.h.b16 %v123
    %v244 = vunpack.c.l.b16 %v124
    %v245 = vunpack.c.h.b16 %v124
    %v246 = vunpack.c.l.b16 %v125
    %v247 = vunpack.c.h.b16 %v125
    %v248 = vunpack.c.l.b16 %v126
    %v249 = vunpack.c.h.b16 %v126
    %v250 = vunpack.c.l.b16 %v127
    %v251 = vunpack.c.h.b16 %v127
    %v252 = vpack.c.b16 %v192, %v188
    %v253 = vpack.c.b16 %v193, %v189
    %v254 = vpack.c.b16 %v194, %v190
    %v255 = vpack.c.b16 %v195, %v191
    %v256 = vpack.c.b16 %v200, %v196
    %v257 = vpack.c.b16 %v201, %v197
    %v258 = vpack.c.b16 %v202, %v198
    %v259 = vpack.c.b16 %v203, %v199
    %v260 = vpack.c.b16 %v208, %v204
    %v261 = vpack.c.b16 %v209, %v205
    %v262 = vpack.c.b16 %v210, %v206
    %v263 = vpack.c.b16 %v211, %v207
    %v264 = vpack.c.b16 %v216, %v212
    %v265 = vpack.c.b16 %v217, %v213
    %v266 = vpack.c.b16 %v218, %v214
    %v267 = vpack.c.b16 %v219, %v215
    %v268 = vpack.c.b16 %v224, %v220
    %v269 = vpack.c.b16 %v225, %v221
    %v270 = vpack.c.b16 %v226, %v222
    %v271 = vpack.c.b16 %v227, %v223
    %v272 = vpack.c.b16 %v232, %v228
    %v273 = vpack.c.b16 %v233, %v229
    %v274 = vpack.c.b16 %v234, %v230
    %v275 = vpack.c.b16 %v235, %v231
    %v276 = vpack.c.b16 %v240, %v236
    %v277 = vpack.c.b16 %v241, %v237
    %v278 = vpack.c.b16 %v242, %v238
    %v279 = vpack.c.b16 %v243, %v239
    %v280 = vpack.c.b16 %v248, %v244
    %v281 = vpack.c.b16 %v249, %v245
    %v282 = vpack.c.b16 %v250, %v246
    %v283 = vpack.c.b16 %v251, %v247
    %316 = vmatprep.subr.bf16.mxu0 %v281
    %317 = vmatpush1.bf16.msra.mxu0 %v280
    %318 = vmatprep.subr.bf16.mxu0 %v277
    %319 = vmatpush1.bf16.msra.mxu0 %v276
    %320 = vmatprep.subr.bf16.mxu0 %v273
    %321 = vmatpush1.bf16.msra.mxu0 %v272
    %322 = vmatprep.subr.bf16.mxu0 %v269
    %323 = vmatpush1.bf16.msra.mxu0 %v268
    %324 = vmatprep.subr.bf16.mxu0 %v265
    %325 = vmatpush1.bf16.msra.mxu0 %v264
    %326 = vmatprep.subr.bf16.mxu0 %v261
    %327 = vmatpush1.bf16.msra.mxu0 %v260
    %328 = vmatprep.subr.bf16.mxu0 %v257
    %329 = vmatpush1.bf16.msra.mxu0 %v256
    %330 = vmatprep.subr.bf16.mxu0 %v253
    %331 = vmatpush1.bf16.msra.mxu0 %v252
    %332 = vmatprep.subr.bf16.mxu0 0
    %333 = vmatpush2.bf16.msra.mxu0 0
    %334 = vmatprep.subr.bf16.mxu0 0
    %335 = vmatpush2.bf16.msra.mxu0 0
    %336 = vmatprep.subr.bf16.mxu0 0
    %337 = vmatpush2.bf16.msra.mxu0 0
    %338 = vmatprep.subr.bf16.mxu0 0
    %339 = vmatpush2.bf16.msra.mxu0 0
    %340 = vmatprep.subr.bf16.mxu0 0
    %341 = vmatpush2.bf16.msra.mxu0 0
    %342 = vmatprep.subr.bf16.mxu0 0
    %343 = vmatpush2.bf16.msra.mxu0 0
    %344 = vmatprep.subr.bf16.mxu0 0
    %345 = vmatpush2.bf16.msra.mxu0 0
    %346 = vmatprep.subr.bf16.mxu0 0
    %347 = vmatpush2.bf16.msra.mxu0 0
    %348 = vmatprep.mubr.bf16.mxu0 0
    %349 = vmatmul.mubr.bf16.gmra.mxu0 %v154
    %v350 = vpop.f32.mrf.mxu0
    %v351 = vadd.f32 %v133, %v350
    %v352 = vpop.f32.mrf.mxu0
    %v353 = vadd.f32 %v137, %v352
    %v354 = vpop.f32.mrf.mxu0
    %v355 = vadd.f32 %v133, %v354
    %v356 = vpop.f32.mrf.mxu0
    %v357 = vadd.f32 %v137, %v356
    %358 = vdwg.mxu0
    %359 = vmatprep.subr.bf16.mxu0 %v283
    %360 = vmatpush1.bf16.msra.mxu0 %v282
    %361 = vmatprep.subr.bf16.mxu0 %v279
    %362 = vmatpush1.bf16.msra.mxu0 %v278
    %363 = vmatprep.subr.bf16.mxu0 %v275
    %364 = vmatpush1.bf16.msra.mxu0 %v274
    %365 = vmatprep.subr.bf16.mxu0 %v271
    %366 = vmatpush1.bf16.msra.mxu0 %v270
    %367 = vmatprep.subr.bf16.mxu0 %v267
    %368 = vmatpush1.bf16.msra.mxu0 %v266
    %369 = vmatprep.subr.bf16.mxu0 %v263
    %370 = vmatpush1.bf16.msra.mxu0 %v262
    %371 = vmatprep.subr.bf16.mxu0 %v259
    %372 = vmatpush1.bf16.msra.mxu0 %v258
    %373 = vmatprep.subr.bf16.mxu0 %v255
    %374 = vmatpush1.bf16.msra.mxu0 %v254
    %375 = vmatprep.subr.bf16.mxu0 0
    %376 = vmatpush2.bf16.msra.mxu0 0
    %377 = vmatprep.subr.bf16.mxu0 0
    %378 = vmatpush2.bf16.msra.mxu0 0
    %379 = vmatprep.subr.bf16.mxu0 0
    %380 = vmatpush2.bf16.msra.mxu0 0
    %381 = vmatprep.subr.bf16.mxu0 0
    %382 = vmatpush2.bf16.msra.mxu0 0
    %383 = vmatprep.subr.bf16.mxu0 0
    %384 = vmatpush2.bf16.msra.mxu0 0
    %385 = vmatprep.subr.bf16.mxu0 0
    %386 = vmatpush2.bf16.msra.mxu0 0
    %387 = vmatprep.subr.bf16.mxu0 0
    %388 = vmatpush2.bf16.msra.mxu0 0
    %389 = vmatprep.subr.bf16.mxu0 0
    %390 = vmatpush2.bf16.msra.mxu0 0
    %391 = vmatprep.mubr.bf16.mxu0 0
    %392 = vmatmul.mubr.bf16.gmra.mxu0 %v154
    %v393 = vpop.f32.mrf.mxu0
    %v394 = vadd.f32 %v141, %v393
    %v395 = vpop.f32.mrf.mxu0
    %v396 = vadd.f32 %v145, %v395
    %v397 = vpop.f32.mrf.mxu0
    %v398 = vadd.f32 %v141, %v397
    %v399 = vpop.f32.mrf.mxu0
    %v400 = vadd.f32 %v145, %v399
    %401 = vdwg.mxu0
    %v402 = vmax.f32 %v351, 0.0
    %v403 = vmax.f32 %v353, 0.0
    %v404 = vmax.f32 %v394, 0.0
    %v405 = vmax.f32 %v396, 0.0
    %v406 = vmax.f32 %v355, 0.0
    %v407 = vmax.f32 %v357, 0.0
    %v408 = vmax.f32 %v398, 0.0
    %v409 = vmax.f32 %v400, 0.0
    %v410 = vpack.c.bf16 %v406, %v402
    %v411 = vpack.c.bf16 %v407, %v403
    %v412 = vpack.c.bf16 %v408, %v404
    %v413 = vpack.c.bf16 %v409, %v405
    %v414 = vld [vmem:[#allocation8] sm:$0xff]
    %v415 = vld [vmem:[#allocation8 + $0x8] sm:$0xff]
    %v416 = vld [vmem:[#allocation8 + $0x10] sm:$0xff]
    %v417 = vld [vmem:[#allocation8 + $0x18] sm:$0xff]
    %v418 = vld [vmem:[#allocation8 + $0x20] sm:$0xff]
    %v419 = vld [vmem:[#allocation8 + $0x28] sm:$0xff]
    %v420 = vld [vmem:[#allocation8 + $0x30] sm:$0xff]
    %v421 = vld [vmem:[#allocation8 + $0x38] sm:$0xff]
    %v422 = vld [vmem:[#allocation8 + $0x40] sm:$0xff]
    %v423 = vld [vmem:[#allocation8 + $0x48] sm:$0xff]
    %v424 = vld [vmem:[#allocation8 + $0x50] sm:$0xff]
    %v425 = vld [vmem:[#allocation8 + $0x58] sm:$0xff]
    %v426 = vld [vmem:[#allocation8 + $0x60] sm:$0xff]
    %v427 = vld [vmem:[#allocation8 + $0x68] sm:$0xff]
    %v428 = vld [vmem:[#allocation8 + $0x70] sm:$0xff]
    %v429 = vld [vmem:[#allocation8 + $0x78] sm:$0xff]
    %v430 = vld [vmem:[#allocation8 + $0x80] sm:$0xff]
    %v431 = vld [vmem:[#allocation8 + $0x88] sm:$0xff]
    %v432 = vld [vmem:[#allocation8 + $0x90] sm:$0xff]
    %v433 = vld [vmem:[#allocation8 + $0x98] sm:$0xff]
    %v434 = vld [vmem:[#allocation8 + $0xa0] sm:$0xff]
    %v435 = vld [vmem:[#allocation8 + $0xa8] sm:$0xff]
    %v436 = vld [vmem:[#allocation8 + $0xb0] sm:$0xff]
    %v437 = vld [vmem:[#allocation8 + $0xb8] sm:$0xff]
    %v438 = vld [vmem:[#allocation8 + $0xc0] sm:$0xff]
    %v439 = vld [vmem:[#allocation8 + $0xc8] sm:$0xff]
    %v440 = vld [vmem:[#allocation8 + $0xd0] sm:$0xff]
    %v441 = vld [vmem:[#allocation8 + $0xd8] sm:$0xff]
    %v442 = vld [vmem:[#allocation8 + $0xe0] sm:$0xff]
    %v443 = vld [vmem:[#allocation8 + $0xe8] sm:$0xff]
    %v444 = vld [vmem:[#allocation8 + $0xf0] sm:$0xff]
    %v445 = vld [vmem:[#allocation8 + $0xf8] sm:$0xff]
    %v446 = vld [vmem:[#allocation8 + $0x100] sm:$0xff]
    %v447 = vld [vmem:[#allocation8 + $0x108] sm:$0xff]
    %v448 = vld [vmem:[#allocation8 + $0x110] sm:$0xff]
    %v449 = vld [vmem:[#allocation8 + $0x118] sm:$0xff]
    %v450 = vld [vmem:[#allocation8 + $0x120] sm:$0xff]
    %v451 = vld [vmem:[#allocation8 + $0x128] sm:$0xff]
    %v452 = vld [vmem:[#allocation8 + $0x130] sm:$0xff]
    %v453 = vld [vmem:[#allocation8 + $0x138] sm:$0xff]
    %v454 = vld [vmem:[#allocation8 + $0x140] sm:$0xff]
    %v455 = vld [vmem:[#allocation8 + $0x148] sm:$0xff]
    %v456 = vld [vmem:[#allocation8 + $0x150] sm:$0xff]
    %v457 = vld [vmem:[#allocation8 + $0x158] sm:$0xff]
    %v458 = vld [vmem:[#allocation8 + $0x160] sm:$0xff]
    %v459 = vld [vmem:[#allocation8 + $0x168] sm:$0xff]
    %v460 = vld [vmem:[#allocation8 + $0x170] sm:$0xff]
    %v461 = vld [vmem:[#allocation8 + $0x178] sm:$0xff]
    %v462 = vld [vmem:[#allocation8 + $0x180] sm:$0xff]
    %v463 = vld [vmem:[#allocation8 + $0x188] sm:$0xff]
    %v464 = vld [vmem:[#allocation8 + $0x190] sm:$0xff]
    %v465 = vld [vmem:[#allocation8 + $0x198] sm:$0xff]
    %v466 = vld [vmem:[#allocation8 + $0x1a0] sm:$0xff]
    %v467 = vld [vmem:[#allocation8 + $0x1a8] sm:$0xff]
    %v468 = vld [vmem:[#allocation8 + $0x1b0] sm:$0xff]
    %v469 = vld [vmem:[#allocation8 + $0x1b8] sm:$0xff]
    %v470 = vld [vmem:[#allocation8 + $0x1c0] sm:$0xff]
    %v471 = vld [vmem:[#allocation8 + $0x1c8] sm:$0xff]
    %v472 = vld [vmem:[#allocation8 + $0x1d0] sm:$0xff]
    %v473 = vld [vmem:[#allocation8 + $0x1d8] sm:$0xff]
    %v474 = vld [vmem:[#allocation8 + $0x1e0] sm:$0xff]
    %v475 = vld [vmem:[#allocation8 + $0x1e8] sm:$0xff]
    %v476 = vld [vmem:[#allocation8 + $0x1f0] sm:$0xff]
    %v477 = vld [vmem:[#allocation8 + $0x1f8] sm:$0xff]
    %v478 = vld [vmem:[%s4] sm:$0x3]
    %v480 = vlaneseq
    %v481 = vshrl.u32 %v480, 7
    %v482 = vsub.s32 0, %v481
    %v483 = vrot.slane %v478, %v482
    %v484 = vlaneseq
    %v485 = vshrl.u32 %v484, 7
    %v486 = vsub.s32 1, %v485
    %v487 = vrot.slane %v478, %v486
    %v554 = vunpack.c.l.b16 %v414
    %v555 = vunpack.c.h.b16 %v414
    %v556 = vunpack.c.l.b16 %v415
    %v557 = vunpack.c.h.b16 %v415
    %v558 = vunpack.c.l.b16 %v416
    %v559 = vunpack.c.h.b16 %v416
    %v560 = vunpack.c.l.b16 %v417
    %v561 = vunpack.c.h.b16 %v417
    %v562 = vunpack.c.l.b16 %v418
    %v563 = vunpack.c.h.b16 %v418
    %v564 = vunpack.c.l.b16 %v419
    %v565 = vunpack.c.h.b16 %v419
    %v566 = vunpack.c.l.b16 %v420
    %v567 = vunpack.c.h.b16 %v420
    %v568 = vunpack.c.l.b16 %v421
    %v569 = vunpack.c.h.b16 %v421
    %v570 = vunpack.c.l.b16 %v422
    %v571 = vunpack.c.h.b16 %v422
    %v572 = vunpack.c.l.b16 %v423
    %v573 = vunpack.c.h.b16 %v423
    %v574 = vunpack.c.l.b16 %v424
    %v575 = vunpack.c.h.b16 %v424
    %v576 = vunpack.c.l.b16 %v425
    %v577 = vunpack.c.h.b16 %v425
    %v578 = vunpack.c.l.b16 %v426
    %v579 = vunpack.c.h.b16 %v426
    %v580 = vunpack.c.l.b16 %v427
    %v581 = vunpack.c.h.b16 %v427
    %v582 = vunpack.c.l.b16 %v428
    %v583 = vunpack.c.h.b16 %v428
    %v584 = vunpack.c.l.b16 %v429
    %v585 = vunpack.c.h.b16 %v429
    %v586 = vunpack.c.l.b16 %v430
    %v587 = vunpack.c.h.b16 %v430
    %v588 = vunpack.c.l.b16 %v431
    %v589 = vunpack.c.h.b16 %v431
    %v590 = vunpack.c.l.b16 %v432
    %v591 = vunpack.c.h.b16 %v432
    %v592 = vunpack.c.l.b16 %v433
    %v593 = vunpack.c.h.b16 %v433
    %v594 = vunpack.c.l.b16 %v434
    %v595 = vunpack.c.h.b16 %v434
    %v596 = vunpack.c.l.b16 %v435
    %v597 = vunpack.c.h.b16 %v435
    %v598 = vunpack.c.l.b16 %v436
    %v599 = vunpack.c.h.b16 %v436
    %v600 = vunpack.c.l.b16 %v437
    %v601 = vunpack.c.h.b16 %v437
    %v602 = vunpack.c.l.b16 %v438
    %v603 = vunpack.c.h.b16 %v438
    %v604 = vunpack.c.l.b16 %v439
    %v605 = vunpack.c.h.b16 %v439
    %v606 = vunpack.c.l.b16 %v440
    %v607 = vunpack.c.h.b16 %v440
    %v608 = vunpack.c.l.b16 %v441
    %v609 = vunpack.c.h.b16 %v441
    %v610 = vunpack.c.l.b16 %v442
    %v611 = vunpack.c.h.b16 %v442
    %v612 = vunpack.c.l.b16 %v443
    %v613 = vunpack.c.h.b16 %v443
    %v614 = vunpack.c.l.b16 %v444
    %v615 = vunpack.c.h.b16 %v444
    %v616 = vunpack.c.l.b16 %v445
    %v617 = vunpack.c.h.b16 %v445
    %v618 = vunpack.c.l.b16 %v446
    %v619 = vunpack.c.h.b16 %v446
    %v620 = vunpack.c.l.b16 %v447
    %v621 = vunpack.c.h.b16 %v447
    %v622 = vunpack.c.l.b16 %v448
    %v623 = vunpack.c.h.b16 %v448
    %v624 = vunpack.c.l.b16 %v449
    %v625 = vunpack.c.h.b16 %v449
    %v626 = vunpack.c.l.b16 %v450
    %v627 = vunpack.c.h.b16 %v450
    %v628 = vunpack.c.l.b16 %v451
    %v629 = vunpack.c.h.b16 %v451
    %v630 = vunpack.c.l.b16 %v452
    %v631 = vunpack.c.h.b16 %v452
    %v632 = vunpack.c.l.b16 %v453
    %v633 = vunpack.c.h.b16 %v453
    %v634 = vunpack.c.l.b16 %v454
    %v635 = vunpack.c.h.b16 %v454
    %v636 = vunpack.c.l.b16 %v455
    %v637 = vunpack.c.h.b16 %v455
    %v638 = vunpack.c.l.b16 %v456
    %v639 = vunpack.c.h.b16 %v456
    %v640 = vunpack.c.l.b16 %v457
    %v641 = vunpack.c.h.b16 %v457
    %v642 = vunpack.c.l.b16 %v458
    %v643 = vunpack.c.h.b16 %v458
    %v644 = vunpack.c.l.b16 %v459
    %v645 = vunpack.c.h.b16 %v459
    %v646 = vunpack.c.l.b16 %v460
    %v647 = vunpack.c.h.b16 %v460
    %v648 = vunpack.c.l.b16 %v461
    %v649 = vunpack.c.h.b16 %v461
    %v650 = vunpack.c.l.b16 %v462
    %v651 = vunpack.c.h.b16 %v462
    %v652 = vunpack.c.l.b16 %v463
    %v653 = vunpack.c.h.b16 %v463
    %v654 = vunpack.c.l.b16 %v464
    %v655 = vunpack.c.h.b16 %v464
    %v656 = vunpack.c.l.b16 %v465
    %v657 = vunpack.c.h.b16 %v465
    %v658 = vunpack.c.l.b16 %v466
    %v659 = vunpack.c.h.b16 %v466
    %v660 = vunpack.c.l.b16 %v467
    %v661 = vunpack.c.h.b16 %v467
    %v662 = vunpack.c.l.b16 %v468
    %v663 = vunpack.c.h.b16 %v468
    %v664 = vunpack.c.l.b16 %v469
    %v665 = vunpack.c.h.b16 %v469
    %v666 = vunpack.c.l.b16 %v470
    %v667 = vunpack.c.h.b16 %v470
    %v668 = vunpack.c.l.b16 %v471
    %v669 = vunpack.c.h.b16 %v471
    %v670 = vunpack.c.l.b16 %v472
    %v671 = vunpack.c.h.b16 %v472
    %v672 = vunpack.c.l.b16 %v473
    %v673 = vunpack.c.h.b16 %v473
    %v674 = vunpack.c.l.b16 %v474
    %v675 = vunpack.c.h.b16 %v474
    %v676 = vunpack.c.l.b16 %v475
    %v677 = vunpack.c.h.b16 %v475
    %v678 = vunpack.c.l.b16 %v476
    %v679 = vunpack.c.h.b16 %v476
    %v680 = vunpack.c.l.b16 %v477
    %v681 = vunpack.c.h.b16 %v477
    %v682 = vpack.c.b16 %v556, %v554
    %v683 = vpack.c.b16 %v557, %v555
    %v684 = vpack.c.b16 %v560, %v558
    %v685 = vpack.c.b16 %v561, %v559
    %v686 = vpack.c.b16 %v564, %v562
    %v687 = vpack.c.b16 %v565, %v563
    %v688 = vpack.c.b16 %v568, %v566
    %v689 = vpack.c.b16 %v569, %v567
    %v690 = vpack.c.b16 %v572, %v570
    %v691 = vpack.c.b16 %v573, %v571
    %v692 = vpack.c.b16 %v576, %v574
    %v693 = vpack.c.b16 %v577, %v575
    %v694 = vpack.c.b16 %v580, %v578
    %v695 = vpack.c.b16 %v581, %v579
    %v696 = vpack.c.b16 %v584, %v582
    %v697 = vpack.c.b16 %v585, %v583
    %v698 = vpack.c.b16 %v588, %v586
    %v699 = vpack.c.b16 %v589, %v587
    %v700 = vpack.c.b16 %v592, %v590
    %v701 = vpack.c.b16 %v593, %v591
    %v702 = vpack.c.b16 %v596, %v594
    %v703 = vpack.c.b16 %v597, %v595
    %v704 = vpack.c.b16 %v600, %v598
    %v705 = vpack.c.b16 %v601, %v599
    %v706 = vpack.c.b16 %v604, %v602
    %v707 = vpack.c.b16 %v605, %v603
    %v708 = vpack.c.b16 %v608, %v606
    %v709 = vpack.c.b16 %v609, %v607
    %v710 = vpack.c.b16 %v612, %v610
    %v711 = vpack.c.b16 %v613, %v611
    %v712 = vpack.c.b16 %v616, %v614
    %v713 = vpack.c.b16 %v617, %v615
    %v714 = vpack.c.b16 %v620, %v618
    %v715 = vpack.c.b16 %v621, %v619
    %v716 = vpack.c.b16 %v624, %v622
    %v717 = vpack.c.b16 %v625, %v623
    %v718 = vpack.c.b16 %v628, %v626
    %v719 = vpack.c.b16 %v629, %v627
    %v720 = vpack.c.b16 %v632, %v630
    %v721 = vpack.c.b16 %v633, %v631
    %v722 = vpack.c.b16 %v636, %v634
    %v723 = vpack.c.b16 %v637, %v635
    %v724 = vpack.c.b16 %v640, %v638
    %v725 = vpack.c.b16 %v641, %v639
    %v726 = vpack.c.b16 %v644, %v642
    %v727 = vpack.c.b16 %v645, %v643
    %v728 = vpack.c.b16 %v648, %v646
    %v729 = vpack.c.b16 %v649, %v647
    %v730 = vpack.c.b16 %v652, %v650
    %v731 = vpack.c.b16 %v653, %v651
    %v732 = vpack.c.b16 %v656, %v654
    %v733 = vpack.c.b16 %v657, %v655
    %v734 = vpack.c.b16 %v660, %v658
    %v735 = vpack.c.b16 %v661, %v659
    %v736 = vpack.c.b16 %v664, %v662
    %v737 = vpack.c.b16 %v665, %v663
    %v738 = vpack.c.b16 %v668, %v666
    %v739 = vpack.c.b16 %v669, %v667
    %v740 = vpack.c.b16 %v672, %v670
    %v741 = vpack.c.b16 %v673, %v671
    %v742 = vpack.c.b16 %v676, %v674
    %v743 = vpack.c.b16 %v677, %v675
    %v744 = vpack.c.b16 %v680, %v678
    %v745 = vpack.c.b16 %v681, %v679
    %810 = vmatprep.subr.bf16.mxu0 %v697
    %811 = vmatpush1.bf16.msra.mxu0 %v696
    %812 = vmatprep.subr.bf16.mxu0 %v695
    %813 = vmatpush1.bf16.msra.mxu0 %v694
    %814 = vmatprep.subr.bf16.mxu0 %v693
    %815 = vmatpush1.bf16.msra.mxu0 %v692
    %816 = vmatprep.subr.bf16.mxu0 %v691
    %817 = vmatpush1.bf16.msra.mxu0 %v690
    %818 = vmatprep.subr.bf16.mxu0 %v689
    %819 = vmatpush1.bf16.msra.mxu0 %v688
    %820 = vmatprep.subr.bf16.mxu0 %v687
    %821 = vmatpush1.bf16.msra.mxu0 %v686
    %822 = vmatprep.subr.bf16.mxu0 %v685
    %823 = vmatpush1.bf16.msra.mxu0 %v684
    %824 = vmatprep.subr.bf16.mxu0 %v683
    %825 = vmatpush1.bf16.msra.mxu0 %v682
    %826 = vmatprep.subr.bf16.mxu0 %v713
    %827 = vmatpush2.bf16.msra.mxu0 %v712
    %828 = vmatprep.subr.bf16.mxu0 %v711
    %829 = vmatpush2.bf16.msra.mxu0 %v710
    %830 = vmatprep.subr.bf16.mxu0 %v709
    %831 = vmatpush2.bf16.msra.mxu0 %v708
    %832 = vmatprep.subr.bf16.mxu0 %v707
    %833 = vmatpush2.bf16.msra.mxu0 %v706
    %834 = vmatprep.subr.bf16.mxu0 %v705
    %835 = vmatpush2.bf16.msra.mxu0 %v704
    %836 = vmatprep.subr.bf16.mxu0 %v703
    %837 = vmatpush2.bf16.msra.mxu0 %v702
    %838 = vmatprep.subr.bf16.mxu0 %v701
    %839 = vmatpush2.bf16.msra.mxu0 %v700
    %840 = vmatprep.subr.bf16.mxu0 %v699
    %841 = vmatpush2.bf16.msra.mxu0 %v698
    %842 = vmatprep.mubr.bf16.mxu0 %v411
    %843 = vmatmul.mubr.bf16.gmra.mxu0 %v410
    %v844 = vpop.f32.mrf.mxu0
    %v845 = vadd.f32 %v483, %v844
    %v846 = vpop.f32.mrf.mxu0
    %v847 = vadd.f32 %v487, %v846
    %v848 = vpop.f32.mrf.mxu0
    %v849 = vadd.f32 %v483, %v848
    %v850 = vpop.f32.mrf.mxu0
    %v851 = vadd.f32 %v487, %v850
    %852 = vdwg.mxu0
    %853 = vmatprep.subr.bf16.mxu0 %v729
    %854 = vmatpush1.bf16.msra.mxu0 %v728
    %855 = vmatprep.subr.bf16.mxu0 %v727
    %856 = vmatpush1.bf16.msra.mxu0 %v726
    %857 = vmatprep.subr.bf16.mxu0 %v725
    %858 = vmatpush1.bf16.msra.mxu0 %v724
    %859 = vmatprep.subr.bf16.mxu0 %v723
    %860 = vmatpush1.bf16.msra.mxu0 %v722
    %861 = vmatprep.subr.bf16.mxu0 %v721
    %862 = vmatpush1.bf16.msra.mxu0 %v720
    %863 = vmatprep.subr.bf16.mxu0 %v719
    %864 = vmatpush1.bf16.msra.mxu0 %v718
    %865 = vmatprep.subr.bf16.mxu0 %v717
    %866 = vmatpush1.bf16.msra.mxu0 %v716
    %867 = vmatprep.subr.bf16.mxu0 %v715
    %868 = vmatpush1.bf16.msra.mxu0 %v714
    %869 = vmatprep.subr.bf16.mxu0 %v745
    %870 = vmatpush2.bf16.msra.mxu0 %v744
    %871 = vmatprep.subr.bf16.mxu0 %v743
    %872 = vmatpush2.bf16.msra.mxu0 %v742
    %873 = vmatprep.subr.bf16.mxu0 %v741
    %874 = vmatpush2.bf16.msra.mxu0 %v740
    %875 = vmatprep.subr.bf16.mxu0 %v739
    %876 = vmatpush2.bf16.msra.mxu0 %v738
    %877 = vmatprep.subr.bf16.mxu0 %v737
    %878 = vmatpush2.bf16.msra.mxu0 %v736
    %879 = vmatprep.subr.bf16.mxu0 %v735
    %880 = vmatpush2.bf16.msra.mxu0 %v734
    %881 = vmatprep.subr.bf16.mxu0 %v733
    %882 = vmatpush2.bf16.msra.mxu0 %v732
    %883 = vmatprep.subr.bf16.mxu0 %v731
    %884 = vmatpush2.bf16.msra.mxu0 %v730
    %885 = vmatprep.mubr.bf16.mxu0 %v413
    %886 = vmatmul.mubr.bf16.gmra.mxu0 %v412
    %v887 = vpop.f32.mrf.mxu0
    %v888 = vadd.f32 %v845, %v887
    %v889 = vpop.f32.mrf.mxu0
    %v890 = vadd.f32 %v847, %v889
    %v891 = vpop.f32.mrf.mxu0
    %v892 = vadd.f32 %v849, %v891
    %v893 = vpop.f32.mrf.mxu0
    %v894 = vadd.f32 %v851, %v893
    %895 = vdwg.mxu0
    %v896 = vmax.f32 %v888, 0.0
    %v897 = vmax.f32 %v890, 0.0
    %v898 = vmax.f32 %v892, 0.0
    %v899 = vmax.f32 %v894, 0.0
    %v900 = vpack.c.bf16 %v898, %v896
    %v901 = vpack.c.bf16 %v899, %v897
    %v902 = vld [vmem:[#allocation10] sm:$0xf]
    %v903 = vld [vmem:[#allocation10 + $0x4] sm:$0xf]
    %v904 = vld [vmem:[#allocation10 + $0x8] sm:$0xf]
    %v905 = vld [vmem:[#allocation10 + $0xc] sm:$0xf]
    %v906 = vld [vmem:[#allocation10 + $0x10] sm:$0xf]
    %v907 = vld [vmem:[#allocation10 + $0x14] sm:$0xf]
    %v908 = vld [vmem:[#allocation10 + $0x18] sm:$0xf]
    %v909 = vld [vmem:[#allocation10 + $0x1c] sm:$0xf]
    %v910 = vld [vmem:[#allocation10 + $0x20] sm:$0xf]
    %v911 = vld [vmem:[#allocation10 + $0x24] sm:$0xf]
    %v912 = vld [vmem:[#allocation10 + $0x28] sm:$0xf]
    %v913 = vld [vmem:[#allocation10 + $0x2c] sm:$0xf]
    %v914 = vld [vmem:[#allocation10 + $0x30] sm:$0xf]
    %v915 = vld [vmem:[#allocation10 + $0x34] sm:$0xf]
    %v916 = vld [vmem:[#allocation10 + $0x38] sm:$0xf]
    %v917 = vld [vmem:[#allocation10 + $0x3c] sm:$0xf]
    %v918 = vld [vmem:[#allocation10 + $0x40] sm:$0xf]
    %v919 = vld [vmem:[#allocation10 + $0x44] sm:$0xf]
    %v920 = vld [vmem:[#allocation10 + $0x48] sm:$0xf]
    %v921 = vld [vmem:[#allocation10 + $0x4c] sm:$0xf]
    %v922 = vld [vmem:[#allocation10 + $0x50] sm:$0xf]
    %v923 = vld [vmem:[#allocation10 + $0x54] sm:$0xf]
    %v924 = vld [vmem:[#allocation10 + $0x58] sm:$0xf]
    %v925 = vld [vmem:[#allocation10 + $0x5c] sm:$0xf]
    %v926 = vld [vmem:[#allocation10 + $0x60] sm:$0xf]
    %v927 = vld [vmem:[#allocation10 + $0x64] sm:$0xf]
    %v928 = vld [vmem:[#allocation10 + $0x68] sm:$0xf]
    %v929 = vld [vmem:[#allocation10 + $0x6c] sm:$0xf]
    %v930 = vld [vmem:[#allocation10 + $0x70] sm:$0xf]
    %v931 = vld [vmem:[#allocation10 + $0x74] sm:$0xf]
    %v932 = vld [vmem:[#allocation10 + $0x78] sm:$0xf]
    %v933 = vld [vmem:[#allocation10 + $0x7c] sm:$0xf]
    %v934 = vld [vmem:[%s6] sm:$0x1]
    %v936 = vlaneseq
    %v937 = vshrl.u32 %v936, 7
    %v938 = vsub.s32 0, %v937
    %v939 = vrot.slane %v934, %v938
    %v973 = vunpack.c.l.b16 %v902
    %v974 = vunpack.c.l.b16 %v903
    %v975 = vunpack.c.l.b16 %v904
    %v976 = vunpack.c.l.b16 %v905
    %v977 = vunpack.c.l.b16 %v906
    %v978 = vunpack.c.l.b16 %v907
    %v979 = vunpack.c.l.b16 %v908
    %v980 = vunpack.c.l.b16 %v909
    %v981 = vunpack.c.l.b16 %v910
    %v982 = vunpack.c.l.b16 %v911
    %v983 = vunpack.c.l.b16 %v912
    %v984 = vunpack.c.l.b16 %v913
    %v985 = vunpack.c.l.b16 %v914
    %v986 = vunpack.c.l.b16 %v915
    %v987 = vunpack.c.l.b16 %v916
    %v988 = vunpack.c.l.b16 %v917
    %v989 = vunpack.c.l.b16 %v918
    %v990 = vunpack.c.l.b16 %v919
    %v991 = vunpack.c.l.b16 %v920
    %v992 = vunpack.c.l.b16 %v921
    %v993 = vunpack.c.l.b16 %v922
    %v994 = vunpack.c.l.b16 %v923
    %v995 = vunpack.c.l.b16 %v924
    %v996 = vunpack.c.l.b16 %v925
    %v997 = vunpack.c.l.b16 %v926
    %v998 = vunpack.c.l.b16 %v927
    %v999 = vunpack.c.l.b16 %v928
    %v1000 = vunpack.c.l.b16 %v929
    %v1001 = vunpack.c.l.b16 %v930
    %v1002 = vunpack.c.l.b16 %v931
    %v1003 = vunpack.c.l.b16 %v932
    %v1004 = vunpack.c.l.b16 %v933
    %v1005 = vpack.c.b16 %v974, %v973
    %v1006 = vpack.c.b16 %v976, %v975
    %v1007 = vpack.c.b16 %v978, %v977
    %v1008 = vpack.c.b16 %v980, %v979
    %v1009 = vpack.c.b16 %v982, %v981
    %v1010 = vpack.c.b16 %v984, %v983
    %v1011 = vpack.c.b16 %v986, %v985
    %v1012 = vpack.c.b16 %v988, %v987
    %v1013 = vpack.c.b16 %v990, %v989
    %v1014 = vpack.c.b16 %v992, %v991
    %v1015 = vpack.c.b16 %v994, %v993
    %v1016 = vpack.c.b16 %v996, %v995
    %v1017 = vpack.c.b16 %v998, %v997
    %v1018 = vpack.c.b16 %v1000, %v999
    %v1019 = vpack.c.b16 %v1002, %v1001
    %v1020 = vpack.c.b16 %v1004, %v1003
    %1037 = vmatprep.subr.bf16.mxu0 0
    %1038 = vmatpush1.bf16.msra.mxu0 %v1012
    %1039 = vmatprep.subr.bf16.mxu0 0
    %1040 = vmatpush1.bf16.msra.mxu0 %v1011
    %1041 = vmatprep.subr.bf16.mxu0 0
    %1042 = vmatpush1.bf16.msra.mxu0 %v1010
    %1043 = vmatprep.subr.bf16.mxu0 0
    %1044 = vmatpush1.bf16.msra.mxu0 %v1009
    %1045 = vmatprep.subr.bf16.mxu0 0
    %1046 = vmatpush1.bf16.msra.mxu0 %v1008
    %1047 = vmatprep.subr.bf16.mxu0 0
    %1048 = vmatpush1.bf16.msra.mxu0 %v1007
    %1049 = vmatprep.subr.bf16.mxu0 0
    %1050 = vmatpush1.bf16.msra.mxu0 %v1006
    %1051 = vmatprep.subr.bf16.mxu0 0
    %1052 = vmatpush1.bf16.msra.mxu0 %v1005
    %1053 = vmatprep.subr.bf16.mxu0 0
    %1054 = vmatpush2.bf16.msra.mxu0 %v1020
    %1055 = vmatprep.subr.bf16.mxu0 0
    %1056 = vmatpush2.bf16.msra.mxu0 %v1019
    %1057 = vmatprep.subr.bf16.mxu0 0
    %1058 = vmatpush2.bf16.msra.mxu0 %v1018
    %1059 = vmatprep.subr.bf16.mxu0 0
    %1060 = vmatpush2.bf16.msra.mxu0 %v1017
    %1061 = vmatprep.subr.bf16.mxu0 0
    %1062 = vmatpush2.bf16.msra.mxu0 %v1016
    %1063 = vmatprep.subr.bf16.mxu0 0
    %1064 = vmatpush2.bf16.msra.mxu0 %v1015
    %1065 = vmatprep.subr.bf16.mxu0 0
    %1066 = vmatpush2.bf16.msra.mxu0 %v1014
    %1067 = vmatprep.subr.bf16.mxu0 0
    %1068 = vmatpush2.bf16.msra.mxu0 %v1013
    %1069 = vmatprep.mubr.bf16.mxu0 %v901
    %1070 = vmatmul.mubr.bf16.gmra.mxu0 %v900
    %v1071 = vpop.f32.mrf.mxu0
    %v1072 = vadd.f32 %v939, %v1071
    %v1073 = vpop.f32.mrf.mxu0
    %v1074 = vpop.f32.mrf.mxu0
    %v1075 = vadd.f32 %v939, %v1074
    %v1076 = vpop.f32.mrf.mxu0
    %1077 = vdwg.mxu0
    %1078 = vst [vmem:[#allocation11] sm:$0xff] %v1072
    %1079 = vst [vmem:[#allocation11 + $0x8] sm:$0xff] %v1075
    // Predicated region
    $region50: #{tpu_custom_call.1} parent=1 // pred_check
      _
    $region51: #{tpu_custom_call.1} parent=1 // pred_check_branch
      %1081 = sbr.rel (0) target = $region53
    $region52: #{tpu_custom_call.1} parent=1 // pred_region
      %s1083 = ssub.s32 256, 256
      %1084 = vsyncadd [#allocation4], %s1083
      %s1085 = sshll.u32 [#allocation11], 4
      %s1086 = int_to_ptr.vmem [resolvable:$true] %s1085
      %1091 = dma.vmem_to_hbm [thread:$0]  %s1086, 256, %s7, [#allocation4], 128, 128, 8
    $region53: #{tpu_custom_call.1} parent=1 // pred_fallthru
      _
    // Predicated region
    $region54: #{tpu_custom_call.1} parent=1 // pred_check
      _
    $region55: #{tpu_custom_call.1} parent=1 // pred_check_branch
      %1093 = sbr.rel (0) target = $region57
    $region56: #{tpu_custom_call.1} parent=1 // pred_region
      %1094 = dma.done [#allocation4], 256
    $region57: #{tpu_custom_call.1} parent=1 // pred_fallthru
      _
    %1095 = vsyncpa [#allocation3], 1
    %1096 = vsyncpa [#allocation6], 1
    %1097 = vsyncpa [#allocation9], 1
    %1098 = vsyncpa [#allocation4], 1

</llo_original>
